<compile_context>
chip_gen: v7x
topology: tpu7x:2x2x1
jax: 0.10.0
libtpu: 0.0.40
codegen_flags: <defaults>
</compile_context>

<pallas_src>
import math

import jax
import jax.numpy as jnp
import numpy as np
from jax import lax
from jax.experimental import pallas as pl
from jax.experimental.pallas import tpu as pltpu  # noqa: F401  (kept for TPU backend)

# ---- small config consistent with the module (hidden % heads == 0, head_dim even) ----
B, S = 2, 8
BS = B * S                       # 16
NUM_HEADS = 4
HIDDEN = 32
INTER = 64
HEAD_DIM = HIDDEN // NUM_HEADS   # 8
HD2 = HEAD_DIM // 2              # 4
D2 = HIDDEN // 2                 # 16
HB = NUM_HEADS * BS              # 64 (stacked K/V rows)
EPS = 1e-8
SCALE = HEAD_DIM ** -0.5
INV_SQRT2 = 1.0 / math.sqrt(2.0)
NEG_BIG = -1e30

# NOTE: this config has HEAD_DIM == S (== 8), so the per-head denominator layout
# (one column per head dim) is reused unchanged for the compact attention weights
# (one column per key position).  Revisit if HEAD_DIM != S.

# ---------------------------------------------------------------------------
# Static block masks (numpy -> baked constants inside the jitted wrapper)
# ---------------------------------------------------------------------------
_even = np.array([h * HEAD_DIM + 2 * j for h in range(NUM_HEADS) for j in range(HD2)])
PERM = np.concatenate([_even, _even + 1])          # global [even | odd] column permutation

_r = np.arange(HB)[:, None]
_c = np.arange(HIDDEN)[None, :]
_rhead = _r // BS                                   # head owning stacked-row block
_mask_k = (_rhead == (_c % D2) // HD2).astype(np.float32)   # K stack mask (even/odd layout)
_mask_v = (_rhead == _c // HEAD_DIM).astype(np.float32)     # V stack mask (original layout)
_cf = np.arange(NUM_HEADS * S)[None, :]
_fold = ((_rhead == _cf // S) & ((_r % S) == (_cf % S))).astype(np.float32)  # batch-fold
HMASK = jnp.asarray(np.concatenate([_mask_k, _mask_v, _fold], axis=1))       # (64, 96)

_rq = np.arange(BS)[:, None]
_ck = np.arange(HB)[None, :]
BMASK = jnp.asarray(                                # (16, 64) additive block-diag batch mask
    np.where((_rq // S) == ((_ck % BS) // S), 0.0, NEG_BIG).astype(np.float32))


# ---------------------------------------------------------------------------
# Fused DecoderLayer kernel (single grid point, everything resident in VMEM)
# ---------------------------------------------------------------------------
def decoder_kernel(x_ref, wqkv_ref, wo_ref, cos_ref, sin_ref, hmask_ref, bmask_ref,
                   g1_ref, w1_ref, w2_ref, g2_ref, out_ref):
    x = x_ref[...]                                              # (BS, D)

    # ---- fused QKV projection: one MXU matmul instead of three ----
    qkv = jnp.dot(x, wqkv_ref[...], preferred_element_type=jnp.float32)   # (BS, 3D)
    q = qkv[:, :HIDDEN]             # global [all-even | all-odd] column layout
    k = qkv[:, HIDDEN:2 * HIDDEN]
    v = qkv[:, 2 * HIDDEN:]         # original (interleaved, head-major) layout

    # ---- rotary embedding: one elementwise pass over all heads ----
    cos_t = cos_ref[...]                                        # (BS, D/2)
    sin_t = sin_ref[...]
    qe, qo = q[:, :D2], q[:, D2:]
    ke, ko = k[:, :D2], k[:, D2:]
    q_rot = jnp.concatenate([qe * cos_t - qo * sin_t, qe * sin_t + qo * cos_t], axis=-1)
    k_rot = jnp.concatenate([ke * cos_t - ko * sin_t, ke * sin_t + ko * cos_t], axis=-1)

    hm = hmask_ref[...]                                         # (HB, 3D) 0/1 block masks
    mask_k = hm[:, :HIDDEN]                                     # K stacking (even/odd layout)
    mask_v = hm[:, HIDDEN:2 * HIDDEN]                           # V stacking (orig layout)
    fold = hm[:, 2 * HIDDEN:]                                   # batch-half fold (HB, H*S)
    bmask = bmask_ref[...]                                      # (BS, HB) 0 / -1e30

    # ---- all-head attention via block-stacked K / V (no per-head loop) ----
    k_stack = jnp.tile(k_rot, (NUM_HEADS, 1)) * mask_k          # (HB, D)
    v_stack = jnp.tile(v, (NUM_HEADS, 1)) * mask_v              # (HB, D)

    s = lax.dot_general(q_rot, k_stack, (((1,), (1,)), ((), ())),
                        preferred_element_type=jnp.float32)     # (BS, HB): head h = cols [h*BS,(h+1)*BS)
    s = s * SCALE + bmask
    m = jnp.max(s, axis=-1, keepdims=True)       # per-row global max: per-block softmax invariant
    e = jnp.exp(s - m)                           # cross-batch entries flush to exactly 0

    # per-head row sums, already broadcast across each head's lanes (HEAD_DIM == S here)
    den = jnp.dot(e, mask_v, preferred_element_type=jnp.float32)            # (BS, D)
    inv_den = pl.reciprocal(den, approx=False)

    ctx = jnp.dot(e, v_stack, preferred_element_type=jnp.float32) * inv_den  # (BS, D)
    attw = jnp.dot(e, fold, preferred_element_type=jnp.float32) * inv_den    # (BS, H*S)
    # TODO(synk): user-supplied attn_mask (masked_fill path) not wired in; forward is
    # exercised with attn_mask=None.

    # ---- out projection + residual + RMSNorm ----
    attn_out = jnp.dot(ctx, wo_ref[...], preferred_element_type=jnp.float32)
    h1 = x + attn_out
    h1 = h1 * lax.rsqrt(jnp.mean(h1 * h1, axis=-1, keepdims=True) + EPS) * g1_ref[...]

    # ---- FFN (exact GELU) + residual + RMSNorm ----
    ff = jnp.dot(h1, w1_ref[...], preferred_element_type=jnp.float32)        # (BS, I)
    ff = 0.5 * ff * (1.0 + lax.erf(ff * INV_SQRT2))
    ff = jnp.dot(ff, w2_ref[...], preferred_element_type=jnp.float32)        # (BS, D)
    y = h1 + ff
    y = y * lax.rsqrt(jnp.mean(y * y, axis=-1, keepdims=True) + EPS) * g2_ref[...]

    # single full-width store of the merged [output | attention-weights] slab
    out_ref[...] = jnp.concatenate([y, attw], axis=-1)          # (BS, D + H*S)


# ---------------------------------------------------------------------------
# Wrapper: full DecoderLayer forward (jitted: preprocessing compiled, not eager)
# ---------------------------------------------------------------------------
@jax.jit
def decoder_layer(x, Wq, Wk, Wv, Wo, g1, W1, W2, g2):
    # rotary tables (same formula as the torch version), pre-tiled to (B*S, D/2)
    inv_freq = 1.0 / (10000.0 ** (jnp.arange(0, HEAD_DIM, 2, dtype=jnp.float32) / HEAD_DIM))
    pos = jnp.arange(S, dtype=jnp.float32)
    ang = pos[:, None] * inv_freq[None, :]                      # (S, HD2)
    cos_t = jnp.tile(jnp.cos(ang), (B, NUM_HEADS))              # (BS, D/2)
    sin_t = jnp.tile(jnp.sin(ang), (B, NUM_HEADS))

    # fused QKV weight; Q/K columns permuted to the global [even | odd] layout
    wqkv = jnp.concatenate([Wq.T[:, PERM], Wk.T[:, PERM], Wv.T], axis=1)    # (D, 3D)

    slab = pl.pallas_call(
        decoder_kernel,
        out_shape=jax.ShapeDtypeStruct((BS, HIDDEN + NUM_HEADS * S), jnp.float32),
    )(x.reshape(BS, HIDDEN), wqkv, Wo.T, cos_t, sin_t, HMASK, BMASK,
      g1.reshape(1, HIDDEN), W1.T, W2.T, g2.reshape(1, HIDDEN))

    out = slab[:, :HIDDEN].reshape(B, S, HIDDEN)
    attw = slab[:, HIDDEN:].reshape(B, S, NUM_HEADS, S).transpose(0, 2, 1, 3)
    return out, attw


# ---------------------------------------------------------------------------
# Pure-JAX reference (mirrors the PyTorch forward)
# ---------------------------------------------------------------------------
def ref_decoder(x, Wq, Wk, Wv, Wo, g1, W1, W2, g2):
    q = (x @ Wq.T).reshape(B, S, NUM_HEADS, HEAD_DIM).transpose(0, 2, 1, 3)
    k = (x @ Wk.T).reshape(B, S, NUM_HEADS, HEAD_DIM).transpose(0, 2, 1, 3)
    v = (x @ Wv.T).reshape(B, S, NUM_HEADS, HEAD_DIM).transpose(0, 2, 1, 3)
    inv_freq = 1.0 / (10000.0 ** (jnp.arange(0, HEAD_DIM, 2, dtype=jnp.float32) / HEAD_DIM))
    pos = jnp.arange(S, dtype=jnp.float32)
    sinus = pos[:, None] * inv_freq[None, :]
    cos = jnp.cos(sinus)[None, None]
    sin = jnp.sin(sinus)[None, None]
    q_ = q.reshape(B, NUM_HEADS, S, HD2, 2)
    k_ = k.reshape(B, NUM_HEADS, S, HD2, 2)
    q_rot = jnp.stack([q_[..., 0] * cos - q_[..., 1] * sin,
                       q_[..., 0] * sin + q_[..., 1] * cos], axis=-1).reshape(q.shape)
    k_rot = jnp.stack([k_[..., 0] * cos - k_[..., 1] * sin,
                       k_[..., 0] * sin + k_[..., 1] * cos], axis=-1).reshape(k.shape)
    scores = jnp.einsum('bhqd,bhkd->bhqk', q_rot, k_rot) * SCALE
    attw = jax.nn.softmax(scores, axis=-1)
    ctx = jnp.einsum('bhqk,bhkd->bhqd', attw, v).transpose(0, 2, 1, 3).reshape(B, S, HIDDEN)
    attn_out = ctx @ Wo.T

    h = x + attn_out
    h = h / (jnp.sqrt(jnp.mean(h * h, axis=-1, keepdims=True)) + EPS) * g1
    ff = h @ W1.T
    ff = 0.5 * ff * (1.0 + lax.erf(ff * INV_SQRT2))
    ff = ff @ W2.T
    y = h + ff
    y = y / (jnp.sqrt(jnp.mean(y * y, axis=-1, keepdims=True)) + EPS) * g2
    return y, attw


if __name__ == "__main__":
    key = jax.random.PRNGKey(0)
    kx, kq, kk, kv, ko, k1, k2 = jax.random.split(key, 7)

    x = jax.random.normal(kx, (B, S, HIDDEN), jnp.float32)
    Wq = jax.random.normal(kq, (HIDDEN, HIDDEN), jnp.float32) * 0.05
    Wk = jax.random.normal(kk, (HIDDEN, HIDDEN), jnp.float32) * 0.05
    Wv = jax.random.normal(kv, (HIDDEN, HIDDEN), jnp.float32) * 0.05
    Wo = jax.random.normal(ko, (HIDDEN, HIDDEN), jnp.float32) * 0.05
    W1 = jax.random.normal(k1, (INTER, HIDDEN), jnp.float32) * 0.05
    W2 = jax.random.normal(k2, (HIDDEN, INTER), jnp.float32) * 0.05
    g1 = jnp.ones((HIDDEN,), jnp.float32)   # RMSNorm scales (torch init: ones)
    g2 = jnp.ones((HIDDEN,), jnp.float32)

    out, attw = decoder_layer(x, Wq, Wk, Wv, Wo, g1, W1, W2, g2)
    out = jax.block_until_ready(out)
    attw = jax.block_until_ready(attw)

    out_ref, attw_ref = ref_decoder(x, Wq, Wk, Wv, Wo, g1, W1, W2, g2)
    np.testing.assert_allclose(np.asarray(attw), np.asarray(attw_ref), rtol=1e-4, atol=1e-4)
    np.testing.assert_allclose(np.asarray(out), np.asarray(out_ref), rtol=1e-4, atol=1e-4)

    print("KERNEL_OK")
</pallas_src>

<mosaic_0001>
module attributes {stable_mosaic.version = 11 : i64} {
  func.func @decoder_kernel(%arg0: memref<16x32xf32, #tpu.memory_space<vmem>>, %arg1: memref<32x96xf32, #tpu.memory_space<vmem>>, %arg2: memref<32x32xf32, #tpu.memory_space<vmem>>, %arg3: memref<16x16xf32, #tpu.memory_space<vmem>>, %arg4: memref<16x16xf32, #tpu.memory_space<vmem>>, %arg5: memref<64x96xf32, #tpu.memory_space<vmem>>, %arg6: memref<16x64xf32, #tpu.memory_space<vmem>>, %arg7: memref<1x32xf32, #tpu.memory_space<vmem>>, %arg8: memref<32x64xf32, #tpu.memory_space<vmem>>, %arg9: memref<64x32xf32, #tpu.memory_space<vmem>>, %arg10: memref<1x32xf32, #tpu.memory_space<vmem>>, %arg11: memref<16x64xf32, #tpu.memory_space<vmem>>) attributes {dimension_semantics = [], scalar_prefetch = 0 : i64, scratch_operands = 0 : i64, tpu.core_type = #tpu.core_type<tc>} {
    %c0 = arith.constant 0 : index
    %c0_0 = arith.constant 0 : index
    %0 = vector.load %arg0[%c0, %c0_0] : memref<16x32xf32, #tpu.memory_space<vmem>>, vector<16x32xf32>
    %c0_1 = arith.constant 0 : index
    %c0_2 = arith.constant 0 : index
    %1 = vector.load %arg1[%c0_1, %c0_2] : memref<32x96xf32, #tpu.memory_space<vmem>>, vector<32x96xf32>
    %cst = arith.constant dense<0.000000e+00> : vector<16x96xf32>
    %2 = tpu.matmul %0, %1, %cst {dimension_numbers = #tpu.dot_dimension_numbers<[1], [0], [0], [1], [0, 0, 1, 1], [], []>} : vector<16x32xf32>, vector<32x96xf32>, vector<16x96xf32> -> vector<16x96xf32>
    %3 = vector.extract_strided_slice %2 {offsets = [0, 0], sizes = [16, 32], strides = [1, 1]} : vector<16x96xf32> to vector<16x32xf32>
    %4 = vector.extract_strided_slice %2 {offsets = [0, 32], sizes = [16, 32], strides = [1, 1]} : vector<16x96xf32> to vector<16x32xf32>
    %5 = vector.extract_strided_slice %2 {offsets = [0, 64], sizes = [16, 32], strides = [1, 1]} : vector<16x96xf32> to vector<16x32xf32>
    %c0_3 = arith.constant 0 : index
    %c0_4 = arith.constant 0 : index
    %6 = vector.load %arg3[%c0_3, %c0_4] : memref<16x16xf32, #tpu.memory_space<vmem>>, vector<16x16xf32>
    %c0_5 = arith.constant 0 : index
    %c0_6 = arith.constant 0 : index
    %7 = vector.load %arg4[%c0_5, %c0_6] : memref<16x16xf32, #tpu.memory_space<vmem>>, vector<16x16xf32>
    %8 = vector.extract_strided_slice %3 {offsets = [0, 0], sizes = [16, 16], strides = [1, 1]} : vector<16x32xf32> to vector<16x16xf32>
    %9 = vector.extract_strided_slice %3 {offsets = [0, 16], sizes = [16, 16], strides = [1, 1]} : vector<16x32xf32> to vector<16x16xf32>
    %10 = vector.extract_strided_slice %4 {offsets = [0, 0], sizes = [16, 16], strides = [1, 1]} : vector<16x32xf32> to vector<16x16xf32>
    %11 = vector.extract_strided_slice %4 {offsets = [0, 16], sizes = [16, 16], strides = [1, 1]} : vector<16x32xf32> to vector<16x16xf32>
    %12 = arith.mulf %8, %6 : vector<16x16xf32>
    %13 = arith.mulf %9, %7 : vector<16x16xf32>
    %14 = arith.subf %12, %13 : vector<16x16xf32>
    %15 = arith.mulf %8, %7 : vector<16x16xf32>
    %16 = arith.mulf %9, %6 : vector<16x16xf32>
    %17 = arith.addf %15, %16 : vector<16x16xf32>
    %18 = tpu.concatenate %14, %17 in 1 : vector<16x16xf32>, vector<16x16xf32> -> vector<16x32xf32>
    %19 = arith.mulf %10, %6 : vector<16x16xf32>
    %20 = arith.mulf %11, %7 : vector<16x16xf32>
    %21 = arith.subf %19, %20 : vector<16x16xf32>
    %22 = arith.mulf %10, %7 : vector<16x16xf32>
    %23 = arith.mulf %11, %6 : vector<16x16xf32>
    %24 = arith.addf %22, %23 : vector<16x16xf32>
    %25 = tpu.concatenate %21, %24 in 1 : vector<16x16xf32>, vector<16x16xf32> -> vector<16x32xf32>
    %c0_7 = arith.constant 0 : index
    %c0_8 = arith.constant 0 : index
    %26 = vector.load %arg5[%c0_7, %c0_8] : memref<64x96xf32, #tpu.memory_space<vmem>>, vector<64x96xf32>
    %27 = vector.extract_strided_slice %26 {offsets = [0, 0], sizes = [64, 32], strides = [1, 1]} : vector<64x96xf32> to vector<64x32xf32>
    %28 = vector.extract_strided_slice %26 {offsets = [0, 32], sizes = [64, 32], strides = [1, 1]} : vector<64x96xf32> to vector<64x32xf32>
    %29 = vector.extract_strided_slice %26 {offsets = [0, 64], sizes = [64, 32], strides = [1, 1]} : vector<64x96xf32> to vector<64x32xf32>
    %c0_9 = arith.constant 0 : index
    %c0_10 = arith.constant 0 : index
    %30 = vector.load %arg6[%c0_9, %c0_10] : memref<16x64xf32, #tpu.memory_space<vmem>>, vector<16x64xf32>
    %31 = tpu.concatenate %25, %25, %25, %25 in 0 : vector<16x32xf32>, vector<16x32xf32>, vector<16x32xf32>, vector<16x32xf32> -> vector<64x32xf32>
    %32 = arith.mulf %31, %27 : vector<64x32xf32>
    %33 = tpu.concatenate %5, %5, %5, %5 in 0 : vector<16x32xf32>, vector<16x32xf32>, vector<16x32xf32>, vector<16x32xf32> -> vector<64x32xf32>
    %34 = arith.mulf %33, %28 : vector<64x32xf32>
    %cst_11 = arith.constant dense<0.000000e+00> : vector<16x64xf32>
    %35 = tpu.matmul %18, %32, %cst_11 {dimension_numbers = #tpu.dot_dimension_numbers<[1], [1], [0], [0], [0, 0, 1, 0], [], []>} : vector<16x32xf32>, vector<64x32xf32>, vector<16x64xf32> -> vector<16x64xf32>
    %cst_12 = arith.constant 0.353553385 : f32
    %36 = vector.broadcast %cst_12 : f32 to vector<16x64xf32>
    %37 = arith.mulf %35, %36 : vector<16x64xf32>
    %38 = arith.addf %37, %30 : vector<16x64xf32>
    %cst_13 = arith.constant dense<0xFF800000> : vector<16xf32>
    %39 = vector.multi_reduction <maximumf>, %38, %cst_13 [1] : vector<16x64xf32> to vector<16xf32>
    %40 = vector.shape_cast %39 : vector<16xf32> to vector<16x1xf32>
    %41 = vector.broadcast %40 : vector<16x1xf32> to vector<16x64xf32>
    %42 = arith.subf %38, %41 : vector<16x64xf32>
    %43 = math.exp %42 : vector<16x64xf32>
    %cst_14 = arith.constant dense<0.000000e+00> : vector<16x32xf32>
    %44 = tpu.matmul %43, %28, %cst_14 {dimension_numbers = #tpu.dot_dimension_numbers<[1], [0], [0], [1], [0, 0, 1, 1], [], []>} : vector<16x64xf32>, vector<64x32xf32>, vector<16x32xf32> -> vector<16x32xf32>
    %45 = tpu.reciprocal %44 : vector<16x32xf32> -> vector<16x32xf32>
    %cst_15 = arith.constant dense<0.000000e+00> : vector<16x32xf32>
    %46 = tpu.matmul %43, %34, %cst_15 {dimension_numbers = #tpu.dot_dimension_numbers<[1], [0], [0], [1], [0, 0, 1, 1], [], []>} : vector<16x64xf32>, vector<64x32xf32>, vector<16x32xf32> -> vector<16x32xf32>
    %47 = arith.mulf %46, %45 : vector<16x32xf32>
    %cst_16 = arith.constant dense<0.000000e+00> : vector<16x32xf32>
    %48 = tpu.matmul %43, %29, %cst_16 {dimension_numbers = #tpu.dot_dimension_numbers<[1], [0], [0], [1], [0, 0, 1, 1], [], []>} : vector<16x64xf32>, vector<64x32xf32>, vector<16x32xf32> -> vector<16x32xf32>
    %49 = arith.mulf %48, %45 : vector<16x32xf32>
    %c0_17 = arith.constant 0 : index
    %c0_18 = arith.constant 0 : index
    %50 = vector.load %arg2[%c0_17, %c0_18] : memref<32x32xf32, #tpu.memory_space<vmem>>, vector<32x32xf32>
    %cst_19 = arith.constant dense<0.000000e+00> : vector<16x32xf32>
    %51 = tpu.matmul %47, %50, %cst_19 {dimension_numbers = #tpu.dot_dimension_numbers<[1], [0], [0], [1], [0, 0, 1, 1], [], []>} : vector<16x32xf32>, vector<32x32xf32>, vector<16x32xf32> -> vector<16x32xf32>
    %52 = arith.addf %0, %51 : vector<16x32xf32>
    %53 = arith.mulf %52, %52 : vector<16x32xf32>
    %cst_20 = arith.constant dense<0.000000e+00> : vector<16xf32>
    %54 = vector.multi_reduction <add>, %53, %cst_20 [1] : vector<16x32xf32> to vector<16xf32>
    %55 = vector.shape_cast %54 : vector<16xf32> to vector<16x1xf32>
    %cst_21 = arith.constant 3.200000e+01 : f32
    %56 = vector.broadcast %cst_21 : f32 to vector<16x1xf32>
    %57 = arith.divf %55, %56 : vector<16x1xf32>
    %cst_22 = arith.constant 9.99999993E-9 : f32
    %58 = vector.broadcast %cst_22 : f32 to vector<16x1xf32>
    %59 = arith.addf %57, %58 : vector<16x1xf32>
    %60 = math.rsqrt %59 : vector<16x1xf32>
    %61 = vector.broadcast %60 : vector<16x1xf32> to vector<16x32xf32>
    %62 = arith.mulf %52, %61 : vector<16x32xf32>
    %c0_23 = arith.constant 0 : index
    %c0_24 = arith.constant 0 : index
    %63 = vector.load %arg7[%c0_23, %c0_24] : memref<1x32xf32, #tpu.memory_space<vmem>>, vector<1x32xf32>
    %64 = vector.broadcast %63 : vector<1x32xf32> to vector<16x32xf32>
    %65 = arith.mulf %62, %64 : vector<16x32xf32>
    %c0_25 = arith.constant 0 : index
    %c0_26 = arith.constant 0 : index
    %66 = vector.load %arg8[%c0_25, %c0_26] : memref<32x64xf32, #tpu.memory_space<vmem>>, vector<32x64xf32>
    %cst_27 = arith.constant dense<0.000000e+00> : vector<16x64xf32>
    %67 = tpu.matmul %65, %66, %cst_27 {dimension_numbers = #tpu.dot_dimension_numbers<[1], [0], [0], [1], [0, 0, 1, 1], [], []>} : vector<16x32xf32>, vector<32x64xf32>, vector<16x64xf32> -> vector<16x64xf32>
    %cst_28 = arith.constant 5.000000e-01 : f32
    %68 = vector.broadcast %cst_28 : f32 to vector<16x64xf32>
    %69 = arith.mulf %68, %67 : vector<16x64xf32>
    %cst_29 = arith.constant 0.707106769 : f32
    %70 = vector.broadcast %cst_29 : f32 to vector<16x64xf32>
    %71 = arith.mulf %67, %70 : vector<16x64xf32>
    %72 = math.erf %71 : vector<16x64xf32>
    %cst_30 = arith.constant 1.000000e+00 : f32
    %73 = vector.broadcast %cst_30 : f32 to vector<16x64xf32>
    %74 = arith.addf %73, %72 : vector<16x64xf32>
    %75 = arith.mulf %69, %74 : vector<16x64xf32>
    %c0_31 = arith.constant 0 : index
    %c0_32 = arith.constant 0 : index
    %76 = vector.load %arg9[%c0_31, %c0_32] : memref<64x32xf32, #tpu.memory_space<vmem>>, vector<64x32xf32>
    %cst_33 = arith.constant dense<0.000000e+00> : vector<16x32xf32>
    %77 = tpu.matmul %75, %76, %cst_33 {dimension_numbers = #tpu.dot_dimension_numbers<[1], [0], [0], [1], [0, 0, 1, 1], [], []>} : vector<16x64xf32>, vector<64x32xf32>, vector<16x32xf32> -> vector<16x32xf32>
    %78 = arith.addf %65, %77 : vector<16x32xf32>
    %79 = arith.mulf %78, %78 : vector<16x32xf32>
    %cst_34 = arith.constant dense<0.000000e+00> : vector<16xf32>
    %80 = vector.multi_reduction <add>, %79, %cst_34 [1] : vector<16x32xf32> to vector<16xf32>
    %81 = vector.shape_cast %80 : vector<16xf32> to vector<16x1xf32>
    %cst_35 = arith.constant 3.200000e+01 : f32
    %82 = vector.broadcast %cst_35 : f32 to vector<16x1xf32>
    %83 = arith.divf %81, %82 : vector<16x1xf32>
    %cst_36 = arith.constant 9.99999993E-9 : f32
    %84 = vector.broadcast %cst_36 : f32 to vector<16x1xf32>
    %85 = arith.addf %83, %84 : vector<16x1xf32>
    %86 = math.rsqrt %85 : vector<16x1xf32>
    %87 = vector.broadcast %86 : vector<16x1xf32> to vector<16x32xf32>
    %88 = arith.mulf %78, %87 : vector<16x32xf32>
    %c0_37 = arith.constant 0 : index
    %c0_38 = arith.constant 0 : index
    %89 = vector.load %arg10[%c0_37, %c0_38] : memref<1x32xf32, #tpu.memory_space<vmem>>, vector<1x32xf32>
    %90 = vector.broadcast %89 : vector<1x32xf32> to vector<16x32xf32>
    %91 = arith.mulf %88, %90 : vector<16x32xf32>
    %92 = tpu.concatenate %91, %49 in 1 : vector<16x32xf32>, vector<16x32xf32> -> vector<16x64xf32>
    %c0_39 = arith.constant 0 : index
    %c0_40 = arith.constant 0 : index
    %93 = vector.load %arg11[%c0_39, %c0_40] : memref<16x64xf32, #tpu.memory_space<vmem>>, vector<16x64xf32>
    tpu.vector_store %arg11[%c0_39, %c0_40], %92 {strides = array<i32>} : memref<16x64xf32, #tpu.memory_space<vmem>>, vector<16x64xf32>,
    return
  }
}

</mosaic_0001>

<llo_original>
// kernel: tile.18
$region0: #{tile.18}
  #allocation0 [shape = 's32[1]{0}', space=sflag, size = 0x4, scoped, tag = 'scoped memory for tile.18']
  %s0 = inlined_call_operand.vmem [shape: f32[8,4], index: 0, kind: input, shape index: {}]
  %s1 = inlined_call_operand.vmem [shape: f32[2,8,4,4], index: 1, kind: output, shape index: {}]
  // Predicated region
  $region2: #{tile.18} parent=0 // pred_check
    _
  $region3: #{tile.18} parent=0 // pred_check_branch
    %3 = sbr.rel (0) target = $region5
  $region4: #{tile.18} parent=0 // pred_region
    _
  $region5: #{tile.18} parent=0 // pred_fallthru
    _
  %v4 = vld [vmem:[%s0] ss:$0 sm:$0xff]
  %5 = vst [vmem:[%s1] sm:$0x3] %v4
  %s6 = scalar_lea.vmem %s1, 8
  %7 = vst [vmem:[%s6] sm:$0x3] %v4
  %s8 = scalar_lea.vmem %s1, 16
  %9 = vst [vmem:[%s8] sm:$0x3] %v4
  %s10 = scalar_lea.vmem %s1, 24
  %11 = vst [vmem:[%s10] sm:$0x3] %v4
  %s12 = scalar_lea.vmem %s0, 1
  %v13 = vld [vmem:[%s12] ss:$0 sm:$0xff]
  %s14 = scalar_lea.vmem %s1, 2
  %15 = vst [vmem:[%s14] sm:$0x3] %v13
  %s16 = scalar_lea.vmem %s1, 10
  %17 = vst [vmem:[%s16] sm:$0x3] %v13
  %s18 = scalar_lea.vmem %s1, 18
  %19 = vst [vmem:[%s18] sm:$0x3] %v13
  %s20 = scalar_lea.vmem %s1, 26
  %21 = vst [vmem:[%s20] sm:$0x3] %v13
  %s22 = scalar_lea.vmem %s0, 2
  %v23 = vld [vmem:[%s22] ss:$0 sm:$0xff]
  %s24 = scalar_lea.vmem %s1, 4
  %25 = vst [vmem:[%s24] sm:$0x3] %v23
  %s26 = scalar_lea.vmem %s1, 12
  %27 = vst [vmem:[%s26] sm:$0x3] %v23
  %s28 = scalar_lea.vmem %s1, 20
  %29 = vst [vmem:[%s28] sm:$0x3] %v23
  %s30 = scalar_lea.vmem %s1, 28
  %31 = vst [vmem:[%s30] sm:$0x3] %v23
  %s32 = scalar_lea.vmem %s0, 3
  %v33 = vld [vmem:[%s32] ss:$0 sm:$0xff]
  %s34 = scalar_lea.vmem %s1, 6
  %35 = vst [vmem:[%s34] sm:$0x3] %v33
  %s36 = scalar_lea.vmem %s1, 14
  %37 = vst [vmem:[%s36] sm:$0x3] %v33
  %s38 = scalar_lea.vmem %s1, 22
  %39 = vst [vmem:[%s38] sm:$0x3] %v33
  %s40 = scalar_lea.vmem %s1, 30
  %41 = vst [vmem:[%s40] sm:$0x3] %v33

// kernel: tile.19
$region0: #{tile.19}
  %s0 = inlined_call_operand.vmem [shape: f32[2,8,4,4], index: 0, kind: input, shape index: {}]
  %s1 = inlined_call_operand.vmem [shape: f32[16,16], index: 1, kind: output, shape index: {}]
  $region1: #{tile.19} parent=0
    #allocation0 [shape = 'u8[65536]{0}', space=vmem, size = 0x10000, scoped, tag = 'scoped mem for input reshape']
    %s3 = sshllo.u32 0, 2
    %s4 = smul.addr 2, 15
    %s5 = scalar_lea.vmem %s0, %s4
    %v6 = vld [vmem:[%s5] sm:%s3]
    %s7 = scalar_lea.vmem [#allocation0], 120
    %8 = vst [vmem:[%s7] sm:%s3] %v6
    %s9 = smul.addr 2, 14
    %s10 = scalar_lea.vmem %s0, %s9
    %v11 = vld [vmem:[%s10] sm:%s3]
    %s12 = scalar_lea.vmem [#allocation0], 112
    %13 = vst [vmem:[%s12] sm:%s3] %v11
    %s14 = smul.addr 2, 13
    %s15 = scalar_lea.vmem %s0, %s14
    %v16 = vld [vmem:[%s15] sm:%s3]
    %s17 = scalar_lea.vmem [#allocation0], 104
    %18 = vst [vmem:[%s17] sm:%s3] %v16
    %s19 = smul.addr 2, 12
    %s20 = scalar_lea.vmem %s0, %s19
    %v21 = vld [vmem:[%s20] sm:%s3]
    %s22 = scalar_lea.vmem [#allocation0], 96
    %23 = vst [vmem:[%s22] sm:%s3] %v21
    %s24 = smul.addr 2, 11
    %s25 = scalar_lea.vmem %s0, %s24
    %v26 = vld [vmem:[%s25] sm:%s3]
    %s27 = scalar_lea.vmem [#allocation0], 88
    %28 = vst [vmem:[%s27] sm:%s3] %v26
    %s29 = smul.addr 2, 10
    %s30 = scalar_lea.vmem %s0, %s29
    %v31 = vld [vmem:[%s30] sm:%s3]
    %s32 = scalar_lea.vmem [#allocation0], 80
    %33 = vst [vmem:[%s32] sm:%s3] %v31
    %s34 = smul.addr 2, 9
    %s35 = scalar_lea.vmem %s0, %s34
    %v36 = vld [vmem:[%s35] sm:%s3]
    %s37 = scalar_lea.vmem [#allocation0], 72
    %38 = vst [vmem:[%s37] sm:%s3] %v36
    %s39 = smul.addr 2, 8
    %s40 = scalar_lea.vmem %s0, %s39
    %v41 = vld [vmem:[%s40] sm:%s3]
    %s42 = scalar_lea.vmem [#allocation0], 64
    %43 = vst [vmem:[%s42] sm:%s3] %v41
    %s44 = smul.addr 2, 7
    %s45 = scalar_lea.vmem %s0, %s44
    %v46 = vld [vmem:[%s45] sm:%s3]
    %s47 = scalar_lea.vmem [#allocation0], 56
    %48 = vst [vmem:[%s47] sm:%s3] %v46
    %s49 = smul.addr 2, 6
    %s50 = scalar_lea.vmem %s0, %s49
    %v51 = vld [vmem:[%s50] sm:%s3]
    %s52 = scalar_lea.vmem [#allocation0], 48
    %53 = vst [vmem:[%s52] sm:%s3] %v51
    %s54 = smul.addr 2, 5
    %s55 = scalar_lea.vmem %s0, %s54
    %v56 = vld [vmem:[%s55] sm:%s3]
    %s57 = scalar_lea.vmem [#allocation0], 40
    %58 = vst [vmem:[%s57] sm:%s3] %v56
    %s59 = smul.addr 2, 4
    %s60 = scalar_lea.vmem %s0, %s59
    %v61 = vld [vmem:[%s60] sm:%s3]
    %s62 = scalar_lea.vmem [#allocation0], 32
    %63 = vst [vmem:[%s62] sm:%s3] %v61
    %s64 = smul.addr 2, 3
    %s65 = scalar_lea.vmem %s0, %s64
    %v66 = vld [vmem:[%s65] sm:%s3]
    %s67 = scalar_lea.vmem [#allocation0], 24
    %68 = vst [vmem:[%s67] sm:%s3] %v66
    %s69 = smul.addr 2, 2
    %s70 = scalar_lea.vmem %s0, %s69
    %v71 = vld [vmem:[%s70] sm:%s3]
    %s72 = scalar_lea.vmem [#allocation0], 16
    %73 = vst [vmem:[%s72] sm:%s3] %v71
    %s74 = scalar_lea.vmem %s0, 2
    %v75 = vld [vmem:[%s74] sm:%s3]
    %s76 = scalar_lea.vmem [#allocation0], 8
    %77 = vst [vmem:[%s76] sm:%s3] %v75
    %v78 = vld [vmem:[%s0] sm:%s3]
    %79 = vst [vmem:[#allocation0] sm:%s3] %v78
    %v80 = vld [vmem:[#allocation0] ss:$8 sm:$0xf]
    %v81 = vld [vmem:[#allocation0] ss:$8 sm:$0xf0]
    %vm82 = vcmask 1047556
    %v83 = vsel %vm82, %v81, %v80
    %vm84 = vcmask 64512
    %85 = vst.msk [vmem:[%s1] sm:$0xff] %vm84, %v83
    %s86 = scalar_lea.vmem [#allocation0], 64
    %v87 = vld [vmem:[%s86] ss:$8 sm:$0xf]
    %s88 = scalar_lea.vmem [#allocation0], 64
    %v89 = vld [vmem:[%s88] ss:$8 sm:$0xf0]
    %vm90 = vcmask 1047556
    %v91 = vsel %vm90, %v89, %v87
    %vm92 = vcmask 64512
    %s93 = scalar_lea.vmem %s1, 8
    %94 = vst.msk [vmem:[%s93] sm:$0xff] %vm92, %v91
    %s95 = scalar_lea.vmem [#allocation0], 1
    %v96 = vld [vmem:[%s95] ss:$8 sm:$0xf]
    %s97 = scalar_lea.vmem [#allocation0], 1
    %v98 = vld [vmem:[%s97] ss:$8 sm:$0xf0]
    %vm99 = vcmask 1047556
    %v100 = vsel %vm99, %v98, %v96
    %101 = vrot.lane.b32.xlu0 %v100, 8
    %v102 = vpop.permute.xlu0 %101
    %vm103 = vcmask 130112
    %104 = vst.msk [vmem:[%s1] sm:$0xff] %vm103, %v102
    %s105 = scalar_lea.vmem [#allocation0], 65
    %v106 = vld [vmem:[%s105] ss:$8 sm:$0xf]
    %s107 = scalar_lea.vmem [#allocation0], 65
    %v108 = vld [vmem:[%s107] ss:$8 sm:$0xf0]
    %vm109 = vcmask 1047556
    %v110 = vsel %vm109, %v108, %v106
    %111 = vrot.lane.b32.xlu0 %v110, 8
    %v112 = vpop.permute.xlu0 %111
    %vm113 = vcmask 130112
    %s114 = scalar_lea.vmem %s1, 8
    %115 = vst.msk [vmem:[%s114] sm:$0xff] %vm113, %v112

// kernel: decoder_layer.1
$region0: #{decoder_layer.1}
  #allocation0 [shape = 'u32[]', space=smem, size = 0x4, offset = 0x4, fixed_abs, tag = 'smem constant byte address 0x4 - core index']
  #allocation1 [shape = 'u32[144,128]{1,0:T(1,128)}', space=vmem, size = 0x12000, scoped, tag = 'internal scratch']
  %s0 = inlined_call_operand.vmem [shape: f32[16,32], index: 0, kind: input, shape index: {}]
  %s1 = inlined_call_operand.vmem [shape: f32[32,96], index: 1, kind: input, shape index: {}]
  %s2 = inlined_call_operand.vmem [shape: f32[32,32], index: 2, kind: input, shape index: {}]
  %s3 = inlined_call_operand.vmem [shape: f32[16,16], index: 3, kind: input, shape index: {}]
  %s4 = inlined_call_operand.vmem [shape: f32[16,16], index: 4, kind: input, shape index: {}]
  %s5 = inlined_call_operand.vmem [shape: f32[64,96], index: 5, kind: input, shape index: {}]
  %s6 = inlined_call_operand.vmem [shape: f32[16,64], index: 6, kind: input, shape index: {}]
  %s7 = inlined_call_operand.vmem [shape: f32[1,32], index: 7, kind: input, shape index: {}]
  %s8 = inlined_call_operand.vmem [shape: f32[32,64], index: 8, kind: input, shape index: {}]
  %s9 = inlined_call_operand.vmem [shape: f32[64,32], index: 9, kind: input, shape index: {}]
  %s10 = inlined_call_operand.vmem [shape: f32[1,32], index: 10, kind: input, shape index: {}]
  %s11 = inlined_call_operand.vmem [shape: f32[16,64], index: 11, kind: output, shape index: {}]
  %s12 = sld [smem:[#allocation0]]
  $region54: #{decoder_layer.1} parent=0
    _
  %s14 = ssub.s32 1, %s12
  %s15 = scalar_select 0, %s14, %s12
  // Predicated region
  $region2: #{decoder_layer.1} parent=0 // pred_check
    _
  $region3: #{decoder_layer.1} parent=0 // pred_check_branch
    %17 = sbr.rel (0) target = $region5
  $region4: #{decoder_layer.1} parent=0 // pred_region
    _
  $region5: #{decoder_layer.1} parent=0 // pred_fallthru
    _
  // Predicated region
  $region6: #{decoder_layer.1} parent=0 // pred_check
    _
  $region7: #{decoder_layer.1} parent=0 // pred_check_branch
    %19 = sbr.rel (0) target = $region9
  $region8: #{decoder_layer.1} parent=0 // pred_region
    _
  $region9: #{decoder_layer.1} parent=0 // pred_fallthru
    _
  // Predicated region
  $region10: #{decoder_layer.1} parent=0 // pred_check
    _
  $region11: #{decoder_layer.1} parent=0 // pred_check_branch
    %21 = sbr.rel (0) target = $region13
  $region12: #{decoder_layer.1} parent=0 // pred_region
    _
  $region13: #{decoder_layer.1} parent=0 // pred_fallthru
    _
  // Predicated region
  $region14: #{decoder_layer.1} parent=0 // pred_check
    _
  $region15: #{decoder_layer.1} parent=0 // pred_check_branch
    %23 = sbr.rel (0) target = $region17
  $region16: #{decoder_layer.1} parent=0 // pred_region
    _
  $region17: #{decoder_layer.1} parent=0 // pred_fallthru
    _
  // Predicated region
  $region18: #{decoder_layer.1} parent=0 // pred_check
    _
  $region19: #{decoder_layer.1} parent=0 // pred_check_branch
    %25 = sbr.rel (0) target = $region21
  $region20: #{decoder_layer.1} parent=0 // pred_region
    _
  $region21: #{decoder_layer.1} parent=0 // pred_fallthru
    _
  // Predicated region
  $region22: #{decoder_layer.1} parent=0 // pred_check
    _
  $region23: #{decoder_layer.1} parent=0 // pred_check_branch
    %27 = sbr.rel (0) target = $region25
  $region24: #{decoder_layer.1} parent=0 // pred_region
    _
  $region25: #{decoder_layer.1} parent=0 // pred_fallthru
    _
  // Predicated region
  $region26: #{decoder_layer.1} parent=0 // pred_check
    _
  $region27: #{decoder_layer.1} parent=0 // pred_check_branch
    %29 = sbr.rel (0) target = $region29
  $region28: #{decoder_layer.1} parent=0 // pred_region
    _
  $region29: #{decoder_layer.1} parent=0 // pred_fallthru
    _
  // Predicated region
  $region30: #{decoder_layer.1} parent=0 // pred_check
    _
  $region31: #{decoder_layer.1} parent=0 // pred_check_branch
    %31 = sbr.rel (0) target = $region33
  $region32: #{decoder_layer.1} parent=0 // pred_region
    _
  $region33: #{decoder_layer.1} parent=0 // pred_fallthru
    _
  // Predicated region
  $region34: #{decoder_layer.1} parent=0 // pred_check
    _
  $region35: #{decoder_layer.1} parent=0 // pred_check_branch
    %33 = sbr.rel (0) target = $region37
  $region36: #{decoder_layer.1} parent=0 // pred_region
    _
  $region37: #{decoder_layer.1} parent=0 // pred_fallthru
    _
  // Predicated region
  $region38: #{decoder_layer.1} parent=0 // pred_check
    _
  $region39: #{decoder_layer.1} parent=0 // pred_check_branch
    %35 = sbr.rel (0) target = $region41
  $region40: #{decoder_layer.1} parent=0 // pred_region
    _
  $region41: #{decoder_layer.1} parent=0 // pred_fallthru
    _
  // Predicated region
  $region42: #{decoder_layer.1} parent=0 // pred_check
    _
  $region43: #{decoder_layer.1} parent=0 // pred_check_branch
    %37 = sbr.rel (0) target = $region45
  $region44: #{decoder_layer.1} parent=0 // pred_region
    _
  $region45: #{decoder_layer.1} parent=0 // pred_fallthru
    _
  %v38 = vld [vmem:[%s0] sm:$0xff]
  %v39 = vld [vmem:[%s0 + $0x8] sm:$0xff]
  %v40 = vld [vmem:[%s1] sm:$0xff]
  %v41 = vld [vmem:[%s1 + $0x8] sm:$0xff]
  %v42 = vld [vmem:[%s1 + $0x10] sm:$0xff]
  %v43 = vld [vmem:[%s1 + $0x18] sm:$0xff]
  %vm44 = vcmask 261120
  %v46 = vsel %vm44, %v38, 0
  %v49 = vsel %vm44, %v39, 0
  %51 = vmatprep.subr.mxu0 0.0
  %52 = vmatpush1.msra.mxu0 %v40
  %53 = vmatprep.subr.mxu0 0.0
  %54 = vmatpush1.msra.mxu0 %v41
  %55 = vmatprep.subr.mxu0 0.0
  %56 = vmatpush1.msra.mxu0 %v42
  %57 = vmatprep.subr.mxu0 0.0
  %58 = vmatpush1.msra.mxu0 %v43
  %59 = vmatprep.subr.mxu0 0.0
  %60 = vmatpush1.msra.mxu0 0.0
  %61 = vmatprep.subr.mxu0 0.0
  %62 = vmatpush1.msra.mxu0 0.0
  %63 = vmatprep.subr.mxu0 0.0
  %64 = vmatpush1.msra.mxu0 0.0
  %65 = vmatprep.subr.mxu0 0.0
  %66 = vmatpush1.msra.mxu0 0.0
  %67 = vmatprep.subr.mxu0 0.0
  %68 = vmatpush1.msra.mxu0 0.0
  %69 = vmatprep.subr.mxu0 0.0
  %70 = vmatpush1.msra.mxu0 0.0
  %71 = vmatprep.subr.mxu0 0.0
  %72 = vmatpush1.msra.mxu0 0.0
  %73 = vmatprep.subr.mxu0 0.0
  %74 = vmatpush1.msra.mxu0 0.0
  %75 = vmatprep.subr.mxu0 0.0
  %76 = vmatpush1.msra.mxu0 0.0
  %77 = vmatprep.subr.mxu0 0.0
  %78 = vmatpush1.msra.mxu0 0.0
  %79 = vmatprep.subr.mxu0 0.0
  %80 = vmatpush1.msra.mxu0 0.0
  %81 = vmatprep.subr.mxu0 0.0
  %82 = vmatpush1.msra.mxu0 0.0
  %83 = vmatprep.subr.mxu0 0.0
  %84 = vmatpush1.msra.mxu0 0.0
  %85 = vmatprep.subr.mxu0 0.0
  %86 = vmatpush1.msra.mxu0 0.0
  %87 = vmatprep.subr.mxu0 0.0
  %88 = vmatpush1.msra.mxu0 0.0
  %89 = vmatprep.subr.mxu0 0.0
  %90 = vmatpush1.msra.mxu0 0.0
  %91 = vmatprep.subr.mxu0 0.0
  %92 = vmatpush1.msra.mxu0 0.0
  %93 = vmatprep.subr.mxu0 0.0
  %94 = vmatpush1.msra.mxu0 0.0
  %95 = vmatprep.subr.mxu0 0.0
  %96 = vmatpush1.msra.mxu0 0.0
  %97 = vmatprep.subr.mxu0 0.0
  %98 = vmatpush1.msra.mxu0 0.0
  %99 = vmatprep.subr.mxu0 0.0
  %100 = vmatpush1.msra.mxu0 0.0
  %101 = vmatprep.subr.mxu0 0.0
  %102 = vmatpush1.msra.mxu0 0.0
  %103 = vmatprep.subr.mxu0 0.0
  %104 = vmatpush1.msra.mxu0 0.0
  %105 = vmatprep.subr.mxu0 0.0
  %106 = vmatpush1.msra.mxu0 0.0
  %107 = vmatprep.subr.mxu0 0.0
  %108 = vmatpush1.msra.mxu0 0.0
  %109 = vmatprep.subr.mxu0 0.0
  %110 = vmatpush1.msra.mxu0 0.0
  %111 = vmatprep.subr.mxu0 0.0
  %112 = vmatpush1.msra.mxu0 0.0
  %113 = vmatprep.subr.mxu0 0.0
  %114 = vmatpush1.msra.mxu0 0.0
  %115 = vmatprep.mubr.f32.mxu0 0.0
  %116 = vmatmul.mubr.f32.gmra.mrb[0].mxu0 %v46
  %v117 = vpop.f32.mrb[0].mxu0
  %v118 = vadd.f32 0.0, %v117
  %v119 = vpop.f32.mrb[0].mxu0
  %120 = vmatprep.mubr.f32.mxu0 0.0
  %121 = vmatmul.mubr.f32.gmra.mrb[0].mxu0 %v49
  %v122 = vpop.f32.mrb[0].mxu0
  %v123 = vadd.f32 0.0, %v122
  %v124 = vpop.f32.mrb[0].mxu0
  %125 = vdwg.mxu0
  %v126 = vld [vmem:[%s3] sm:$0xff]
  %v127 = vld [vmem:[%s3 + $0x8] sm:$0xff]
  %v128 = vld [vmem:[%s4] sm:$0xff]
  %v129 = vld [vmem:[%s4 + $0x8] sm:$0xff]
  %v130 = vmul.f32 %v118, %v126
  %v131 = vmul.f32 %v123, %v127
  %134 = vrot.lane.b32.xlu0 %v128, 16
  %v135 = vpop.permute.xlu0 %134
  %136 = vrot.lane.b32.xlu0 %v129, 16
  %v137 = vpop.permute.xlu0 %136
  %v140 = vmul.f32 %v118, %v135
  %v141 = vmul.f32 %v123, %v137
  %144 = vrot.lane.b32.xlu0 %v140, 112
  %v145 = vpop.permute.xlu0 %144
  %146 = vrot.lane.b32.xlu0 %v141, 112
  %v147 = vpop.permute.xlu0 %146
  %v150 = vsub.f32 %v130, %v145
  %v151 = vsub.f32 %v131, %v147
  %v152 = vmul.f32 %v118, %v128
  %v153 = vmul.f32 %v123, %v129
  %156 = vrot.lane.b32.xlu0 %v126, 16
  %v157 = vpop.permute.xlu0 %156
  %158 = vrot.lane.b32.xlu0 %v127, 16
  %v159 = vpop.permute.xlu0 %158
  %v162 = vmul.f32 %v118, %v157
  %v163 = vmul.f32 %v123, %v159
  %166 = vrot.lane.b32.xlu0 %v162, 112
  %v167 = vpop.permute.xlu0 %166
  %168 = vrot.lane.b32.xlu0 %v163, 112
  %v169 = vpop.permute.xlu0 %168
  %v172 = vadd.f32 %v152, %v167
  %v173 = vadd.f32 %v153, %v169
  %176 = vrot.lane.b32.xlu0 %v172, 16
  %v177 = vpop.permute.xlu0 %176
  %178 = vrot.lane.b32.xlu0 %v173, 16
  %v179 = vpop.permute.xlu0 %178
  %vm182 = vcmask 130048
  %v183 = vsel %vm182, %v150, %v177
  %v184 = vsel %vm182, %v151, %v179
  %185 = vrot.lane.b32.xlu0 %v126, 32
  %v186 = vpop.permute.xlu0 %185
  %187 = vrot.lane.b32.xlu0 %v127, 32
  %v188 = vpop.permute.xlu0 %187
  %v191 = vmul.f32 %v118, %v186
  %v192 = vmul.f32 %v123, %v188
  %193 = vrot.lane.b32.xlu0 %v128, 48
  %v194 = vpop.permute.xlu0 %193
  %195 = vrot.lane.b32.xlu0 %v129, 48
  %v196 = vpop.permute.xlu0 %195
  %v199 = vmul.f32 %v118, %v194
  %v200 = vmul.f32 %v123, %v196
  %203 = vrot.lane.b32.xlu0 %v199, 112
  %v204 = vpop.permute.xlu0 %203
  %205 = vrot.lane.b32.xlu0 %v200, 112
  %v206 = vpop.permute.xlu0 %205
  %v209 = vsub.f32 %v191, %v204
  %v210 = vsub.f32 %v192, %v206
  %211 = vrot.lane.b32.xlu0 %v128, 32
  %v212 = vpop.permute.xlu0 %211
  %213 = vrot.lane.b32.xlu0 %v129, 32
  %v214 = vpop.permute.xlu0 %213
  %v217 = vmul.f32 %v118, %v212
  %v218 = vmul.f32 %v123, %v214
  %219 = vrot.lane.b32.xlu0 %v126, 48
  %v220 = vpop.permute.xlu0 %219
  %221 = vrot.lane.b32.xlu0 %v127, 48
  %v222 = vpop.permute.xlu0 %221
  %v225 = vmul.f32 %v118, %v220
  %v226 = vmul.f32 %v123, %v222
  %229 = vrot.lane.b32.xlu0 %v225, 112
  %v230 = vpop.permute.xlu0 %229
  %231 = vrot.lane.b32.xlu0 %v226, 112
  %v232 = vpop.permute.xlu0 %231
  %v235 = vadd.f32 %v217, %v230
  %v236 = vadd.f32 %v218, %v232
  %239 = vrot.lane.b32.xlu0 %v209, 96
  %v240 = vpop.permute.xlu0 %239
  %241 = vrot.lane.b32.xlu0 %v210, 96
  %v242 = vpop.permute.xlu0 %241
  %247 = vrot.lane.b32.xlu0 %v235, 112
  %v248 = vpop.permute.xlu0 %247
  %249 = vrot.lane.b32.xlu0 %v236, 112
  %v250 = vpop.permute.xlu0 %249
  %v253 = vsel %vm182, %v240, %v248
  %v254 = vsel %vm182, %v242, %v250
  %v255 = vld [vmem:[%s5] sm:$0xff]
  %v256 = vld [vmem:[%s5 + $0x8] sm:$0xff]
  %v257 = vld [vmem:[%s5 + $0x10] sm:$0xff]
  %v258 = vld [vmem:[%s5 + $0x18] sm:$0xff]
  %v259 = vld [vmem:[%s5 + $0x20] sm:$0xff]
  %v260 = vld [vmem:[%s5 + $0x28] sm:$0xff]
  %v261 = vld [vmem:[%s5 + $0x30] sm:$0xff]
  %v262 = vld [vmem:[%s5 + $0x38] sm:$0xff]
  %v263 = vld [vmem:[%s6] sm:$0xff]
  %v264 = vld [vmem:[%s6 + $0x8] sm:$0xff]
  %v265 = vmul.f32 %v253, %v255
  %v266 = vmul.f32 %v254, %v256
  %v267 = vmul.f32 %v253, %v257
  %v268 = vmul.f32 %v254, %v258
  %v269 = vmul.f32 %v253, %v259
  %v270 = vmul.f32 %v254, %v260
  %v271 = vmul.f32 %v253, %v261
  %v272 = vmul.f32 %v254, %v262
  %281 = vrot.lane.b32.xlu0 %v255, 32
  %v282 = vpop.permute.xlu0 %281
  %283 = vrot.lane.b32.xlu0 %v256, 32
  %v284 = vpop.permute.xlu0 %283
  %285 = vrot.lane.b32.xlu0 %v257, 32
  %v286 = vpop.permute.xlu0 %285
  %287 = vrot.lane.b32.xlu0 %v258, 32
  %v288 = vpop.permute.xlu0 %287
  %289 = vrot.lane.b32.xlu0 %v259, 32
  %v290 = vpop.permute.xlu0 %289
  %291 = vrot.lane.b32.xlu0 %v260, 32
  %v292 = vpop.permute.xlu0 %291
  %293 = vrot.lane.b32.xlu0 %v261, 32
  %v294 = vpop.permute.xlu0 %293
  %295 = vrot.lane.b32.xlu0 %v262, 32
  %v296 = vpop.permute.xlu0 %295
  %v305 = vmul.f32 %v118, %v282
  %v306 = vmul.f32 %v123, %v284
  %v307 = vmul.f32 %v118, %v286
  %v308 = vmul.f32 %v123, %v288
  %v309 = vmul.f32 %v118, %v290
  %v310 = vmul.f32 %v123, %v292
  %v311 = vmul.f32 %v118, %v294
  %v312 = vmul.f32 %v123, %v296
  %v314 = vsel %vm44, %v183, 0
  %v317 = vsel %vm44, %v184, 0
  %v320 = vsel %vm44, %v265, 0
  %v323 = vsel %vm44, %v266, 0
  %v326 = vsel %vm44, %v267, 0
  %v329 = vsel %vm44, %v268, 0
  %v332 = vsel %vm44, %v269, 0
  %v335 = vsel %vm44, %v270, 0
  %v338 = vsel %vm44, %v271, 0
  %v341 = vsel %vm44, %v272, 0
  %343 = vmatprep.subr.mxu0 0.0
  %344 = vmatpush1.xpose.msra.mxu0 %v320
  %345 = vmatprep.subr.mxu0 0.0
  %346 = vmatpush1.xpose.msra.mxu0 %v323
  %347 = vmatprep.subr.mxu0 0.0
  %348 = vmatpush1.xpose.msra.mxu0 %v326
  %349 = vmatprep.subr.mxu0 0.0
  %350 = vmatpush1.xpose.msra.mxu0 %v329
  %351 = vmatprep.subr.mxu0 0.0
  %352 = vmatpush1.xpose.msra.mxu0 %v332
  %353 = vmatprep.subr.mxu0 0.0
  %354 = vmatpush1.xpose.msra.mxu0 %v335
  %355 = vmatprep.subr.mxu0 0.0
  %356 = vmatpush1.xpose.msra.mxu0 %v338
  %357 = vmatprep.subr.mxu0 0.0
  %358 = vmatpush1.xpose.msra.mxu0 %v341
  %359 = vmatprep.subr.mxu0 0.0
  %360 = vmatpush1.xpose.msra.mxu0 0.0
  %361 = vmatprep.subr.mxu0 0.0
  %362 = vmatpush1.xpose.msra.mxu0 0.0
  %363 = vmatprep.subr.mxu0 0.0
  %364 = vmatpush1.xpose.msra.mxu0 0.0
  %365 = vmatprep.subr.mxu0 0.0
  %366 = vmatpush1.xpose.msra.mxu0 0.0
  %367 = vmatprep.subr.mxu0 0.0
  %368 = vmatpush1.xpose.msra.mxu0 0.0
  %369 = vmatprep.subr.mxu0 0.0
  %370 = vmatpush1.xpose.msra.mxu0 0.0
  %371 = vmatprep.subr.mxu0 0.0
  %372 = vmatpush1.xpose.msra.mxu0 0.0
  %373 = vmatprep.subr.mxu0 0.0
  %374 = vmatpush1.xpose.msra.mxu0 0.0
  %375 = vmatprep.subr.mxu0 0.0
  %376 = vmatpush1.xpose.msra.mxu0 0.0
  %377 = vmatprep.subr.mxu0 0.0
  %378 = vmatpush1.xpose.msra.mxu0 0.0
  %379 = vmatprep.subr.mxu0 0.0
  %380 = vmatpush1.xpose.msra.mxu0 0.0
  %381 = vmatprep.subr.mxu0 0.0
  %382 = vmatpush1.xpose.msra.mxu0 0.0
  %383 = vmatprep.subr.mxu0 0.0
  %384 = vmatpush1.xpose.msra.mxu0 0.0
  %385 = vmatprep.subr.mxu0 0.0
  %386 = vmatpush1.xpose.msra.mxu0 0.0
  %387 = vmatprep.subr.mxu0 0.0
  %388 = vmatpush1.xpose.msra.mxu0 0.0
  %389 = vmatprep.subr.mxu0 0.0
  %390 = vmatpush1.xpose.msra.mxu0 0.0
  %391 = vmatprep.subr.mxu0 0.0
  %392 = vmatpush1.xpose.msra.mxu0 0.0
  %393 = vmatprep.subr.mxu0 0.0
  %394 = vmatpush1.xpose.msra.mxu0 0.0
  %395 = vmatprep.subr.mxu0 0.0
  %396 = vmatpush1.xpose.msra.mxu0 0.0
  %397 = vmatprep.subr.mxu0 0.0
  %398 = vmatpush1.xpose.msra.mxu0 0.0
  %399 = vmatprep.subr.mxu0 0.0
  %400 = vmatpush1.xpose.msra.mxu0 0.0
  %401 = vmatprep.subr.mxu0 0.0
  %402 = vmatpush1.xpose.msra.mxu0 0.0
  %403 = vmatprep.subr.mxu0 0.0
  %404 = vmatpush1.xpose.msra.mxu0 0.0
  %405 = vmatprep.subr.mxu0 0.0
  %406 = vmatpush1.xpose.msra.mxu0 0.0
  %407 = vmatprep.mubr.f32.mxu0 0.0
  %408 = vmatmul.mubr.f32.gmra.mrb[0].mxu0 %v314
  %v409 = vpop.f32.mrb[0].mxu0
  %v410 = vadd.f32 0.0, %v409
  %v411 = vpop.f32.mrb[0].mxu0
  %412 = vmatprep.mubr.f32.mxu0 0.0
  %413 = vmatmul.mubr.f32.gmra.mrb[0].mxu0 %v317
  %v414 = vpop.f32.mrb[0].mxu0
  %v415 = vadd.f32 0.0, %v414
  %v416 = vpop.f32.mrb[0].mxu0
  %417 = vdwg.mxu0
  %v418 = vmul.f32 %v410, 0.35355338
  %v419 = vmul.f32 %v415, 0.35355338
  %v420 = vadd.f32 %v418, %v263
  %v421 = vadd.f32 %v419, %v264
  %vm422 = vcmask 523264
  %v423 = vsel %vm422, %v420, -inf
  %424 = vmax.xlane.f32.xlu0 %v423
  %v425 = vpop.xlane.xlu0 %424
  %v426 = vsel %vm422, %v421, -inf
  %427 = vmax.xlane.f32.xlu0 %v426
  %v428 = vpop.xlane.xlu0 %427
  %v429 = vsub.f32 %v420, %v425
  %v430 = vsub.f32 %v421, %v428
  %v431 = vmul.f32 %v429, 1.442695
  %v432 = vpow.pop %v431
  %v433 = vmul.f32 %v430, 1.442695
  %v434 = vpow.pop %v433
  %435 = vrot.lane.b32.xlu0 %v255, 96
  %v436 = vpop.permute.xlu0 %435
  %437 = vrot.lane.b32.xlu0 %v256, 96
  %v438 = vpop.permute.xlu0 %437
  %439 = vrot.lane.b32.xlu0 %v257, 96
  %v440 = vpop.permute.xlu0 %439
  %441 = vrot.lane.b32.xlu0 %v258, 96
  %v442 = vpop.permute.xlu0 %441
  %443 = vrot.lane.b32.xlu0 %v259, 96
  %v444 = vpop.permute.xlu0 %443
  %445 = vrot.lane.b32.xlu0 %v260, 96
  %v446 = vpop.permute.xlu0 %445
  %447 = vrot.lane.b32.xlu0 %v261, 96
  %v448 = vpop.permute.xlu0 %447
  %449 = vrot.lane.b32.xlu0 %v262, 96
  %v450 = vpop.permute.xlu0 %449
  %v460 = vsel %vm422, %v432, 0
  %v463 = vsel %vm422, %v434, 0
  %465 = vmatprep.subr.mxu0 0.0
  %466 = vmatpush1.msra.mxu0 %v436
  %467 = vmatprep.subr.mxu0 0.0
  %468 = vmatpush1.msra.mxu0 %v438
  %469 = vmatprep.subr.mxu0 0.0
  %470 = vmatpush1.msra.mxu0 %v440
  %471 = vmatprep.subr.mxu0 0.0
  %472 = vmatpush1.msra.mxu0 %v442
  %473 = vmatprep.subr.mxu0 0.0
  %474 = vmatpush1.msra.mxu0 %v444
  %475 = vmatprep.subr.mxu0 0.0
  %476 = vmatpush1.msra.mxu0 %v446
  %477 = vmatprep.subr.mxu0 0.0
  %478 = vmatpush1.msra.mxu0 %v448
  %479 = vmatprep.subr.mxu0 0.0
  %480 = vmatpush1.msra.mxu0 %v450
  %481 = vmatprep.subr.mxu0 0.0
  %482 = vmatpush1.msra.mxu0 0.0
  %483 = vmatprep.subr.mxu0 0.0
  %484 = vmatpush1.msra.mxu0 0.0
  %485 = vmatprep.subr.mxu0 0.0
  %486 = vmatpush1.msra.mxu0 0.0
  %487 = vmatprep.subr.mxu0 0.0
  %488 = vmatpush1.msra.mxu0 0.0
  %489 = vmatprep.subr.mxu0 0.0
  %490 = vmatpush1.msra.mxu0 0.0
  %491 = vmatprep.subr.mxu0 0.0
  %492 = vmatpush1.msra.mxu0 0.0
  %493 = vmatprep.subr.mxu0 0.0
  %494 = vmatpush1.msra.mxu0 0.0
  %495 = vmatprep.subr.mxu0 0.0
  %496 = vmatpush1.msra.mxu0 0.0
  %497 = vmatprep.subr.mxu0 0.0
  %498 = vmatpush1.msra.mxu0 0.0
  %499 = vmatprep.subr.mxu0 0.0
  %500 = vmatpush1.msra.mxu0 0.0
  %501 = vmatprep.subr.mxu0 0.0
  %502 = vmatpush1.msra.mxu0 0.0
  %503 = vmatprep.subr.mxu0 0.0
  %504 = vmatpush1.msra.mxu0 0.0
  %505 = vmatprep.subr.mxu0 0.0
  %506 = vmatpush1.msra.mxu0 0.0
  %507 = vmatprep.subr.mxu0 0.0
  %508 = vmatpush1.msra.mxu0 0.0
  %509 = vmatprep.subr.mxu0 0.0
  %510 = vmatpush1.msra.mxu0 0.0
  %511 = vmatprep.subr.mxu0 0.0
  %512 = vmatpush1.msra.mxu0 0.0
  %513 = vmatprep.subr.mxu0 0.0
  %514 = vmatpush1.msra.mxu0 0.0
  %515 = vmatprep.subr.mxu0 0.0
  %516 = vmatpush1.msra.mxu0 0.0
  %517 = vmatprep.subr.mxu0 0.0
  %518 = vmatpush1.msra.mxu0 0.0
  %519 = vmatprep.subr.mxu0 0.0
  %520 = vmatpush1.msra.mxu0 0.0
  %521 = vmatprep.subr.mxu0 0.0
  %522 = vmatpush1.msra.mxu0 0.0
  %523 = vmatprep.subr.mxu0 0.0
  %524 = vmatpush1.msra.mxu0 0.0
  %525 = vmatprep.subr.mxu0 0.0
  %526 = vmatpush1.msra.mxu0 0.0
  %527 = vmatprep.subr.mxu0 0.0
  %528 = vmatpush1.msra.mxu0 0.0
  %529 = vmatprep.mubr.f32.mxu0 0.0
  %530 = vmatmul.mubr.f32.gmra.mrb[0].mxu0 %v460
  %v531 = vpop.f32.mrb[0].mxu0
  %v532 = vadd.f32 0.0, %v531
  %v533 = vpop.f32.mrb[0].mxu0
  %534 = vmatprep.mubr.f32.mxu0 0.0
  %535 = vmatmul.mubr.f32.gmra.mrb[0].mxu0 %v463
  %v536 = vpop.f32.mrb[0].mxu0
  %v537 = vadd.f32 0.0, %v536
  %v538 = vpop.f32.mrb[0].mxu0
  %539 = vdwg.mxu0
  %v540 = vrcp.pop %v532
  %v541 = vrcp.pop %v537
  %550 = vrot.lane.b32.xlu0 %v305, 64
  %v551 = vpop.permute.xlu0 %550
  %552 = vrot.lane.b32.xlu0 %v306, 64
  %v553 = vpop.permute.xlu0 %552
  %554 = vrot.lane.b32.xlu0 %v307, 64
  %v555 = vpop.permute.xlu0 %554
  %556 = vrot.lane.b32.xlu0 %v308, 64
  %v557 = vpop.permute.xlu0 %556
  %558 = vrot.lane.b32.xlu0 %v309, 64
  %v559 = vpop.permute.xlu0 %558
  %560 = vrot.lane.b32.xlu0 %v310, 64
  %v561 = vpop.permute.xlu0 %560
  %562 = vrot.lane.b32.xlu0 %v311, 64
  %v563 = vpop.permute.xlu0 %562
  %564 = vrot.lane.b32.xlu0 %v312, 64
  %v565 = vpop.permute.xlu0 %564
  %574 = vmatprep.subr.mxu0 0.0
  %575 = vmatpush1.msra.mxu0 %v551
  %576 = vmatprep.subr.mxu0 0.0
  %577 = vmatpush1.msra.mxu0 %v553
  %578 = vmatprep.subr.mxu0 0.0
  %579 = vmatpush1.msra.mxu0 %v555
  %580 = vmatprep.subr.mxu0 0.0
  %581 = vmatpush1.msra.mxu0 %v557
  %582 = vmatprep.subr.mxu0 0.0
  %583 = vmatpush1.msra.mxu0 %v559
  %584 = vmatprep.subr.mxu0 0.0
  %585 = vmatpush1.msra.mxu0 %v561
  %586 = vmatprep.subr.mxu0 0.0
  %587 = vmatpush1.msra.mxu0 %v563
  %588 = vmatprep.subr.mxu0 0.0
  %589 = vmatpush1.msra.mxu0 %v565
  %590 = vmatprep.subr.mxu0 0.0
  %591 = vmatpush1.msra.mxu0 0.0
  %592 = vmatprep.subr.mxu0 0.0
  %593 = vmatpush1.msra.mxu0 0.0
  %594 = vmatprep.subr.mxu0 0.0
  %595 = vmatpush1.msra.mxu0 0.0
  %596 = vmatprep.subr.mxu0 0.0
  %597 = vmatpush1.msra.mxu0 0.0
  %598 = vmatprep.subr.mxu0 0.0
  %599 = vmatpush1.msra.mxu0 0.0
  %600 = vmatprep.subr.mxu0 0.0
  %601 = vmatpush1.msra.mxu0 0.0
  %602 = vmatprep.subr.mxu0 0.0
  %603 = vmatpush1.msra.mxu0 0.0
  %604 = vmatprep.subr.mxu0 0.0
  %605 = vmatpush1.msra.mxu0 0.0
  %606 = vmatprep.subr.mxu0 0.0
  %607 = vmatpush1.msra.mxu0 0.0
  %608 = vmatprep.subr.mxu0 0.0
  %609 = vmatpush1.msra.mxu0 0.0
  %610 = vmatprep.subr.mxu0 0.0
  %611 = vmatpush1.msra.mxu0 0.0
  %612 = vmatprep.subr.mxu0 0.0
  %613 = vmatpush1.msra.mxu0 0.0
  %614 = vmatprep.subr.mxu0 0.0
  %615 = vmatpush1.msra.mxu0 0.0
  %616 = vmatprep.subr.mxu0 0.0
  %617 = vmatpush1.msra.mxu0 0.0
  %618 = vmatprep.subr.mxu0 0.0
  %619 = vmatpush1.msra.mxu0 0.0
  %620 = vmatprep.subr.mxu0 0.0
  %621 = vmatpush1.msra.mxu0 0.0
  %622 = vmatprep.subr.mxu0 0.0
  %623 = vmatpush1.msra.mxu0 0.0
  %624 = vmatprep.subr.mxu0 0.0
  %625 = vmatpush1.msra.mxu0 0.0
  %626 = vmatprep.subr.mxu0 0.0
  %627 = vmatpush1.msra.mxu0 0.0
  %628 = vmatprep.subr.mxu0 0.0
  %629 = vmatpush1.msra.mxu0 0.0
  %630 = vmatprep.subr.mxu0 0.0
  %631 = vmatpush1.msra.mxu0 0.0
  %632 = vmatprep.subr.mxu0 0.0
  %633 = vmatpush1.msra.mxu0 0.0
  %634 = vmatprep.subr.mxu0 0.0
  %635 = vmatpush1.msra.mxu0 0.0
  %636 = vmatprep.subr.mxu0 0.0
  %637 = vmatpush1.msra.mxu0 0.0
  %638 = vmatprep.mubr.f32.mxu0 0.0
  %639 = vmatmul.mubr.f32.gmra.mrb[0].mxu0 %v460
  %v640 = vpop.f32.mrb[0].mxu0
  %v641 = vadd.f32 0.0, %v640
  %v642 = vpop.f32.mrb[0].mxu0
  %643 = vmatprep.mubr.f32.mxu0 0.0
  %644 = vmatmul.mubr.f32.gmra.mrb[0].mxu0 %v463
  %v645 = vpop.f32.mrb[0].mxu0
  %v646 = vadd.f32 0.0, %v645
  %v647 = vpop.f32.mrb[0].mxu0
  %648 = vdwg.mxu0
  %v649 = vmul.f32 %v641, %v540
  %v650 = vmul.f32 %v646, %v541
  %651 = vrot.lane.b32.xlu0 %v255, 64
  %v652 = vpop.permute.xlu0 %651
  %653 = vrot.lane.b32.xlu0 %v256, 64
  %v654 = vpop.permute.xlu0 %653
  %655 = vrot.lane.b32.xlu0 %v257, 64
  %v656 = vpop.permute.xlu0 %655
  %657 = vrot.lane.b32.xlu0 %v258, 64
  %v658 = vpop.permute.xlu0 %657
  %659 = vrot.lane.b32.xlu0 %v259, 64
  %v660 = vpop.permute.xlu0 %659
  %661 = vrot.lane.b32.xlu0 %v260, 64
  %v662 = vpop.permute.xlu0 %661
  %663 = vrot.lane.b32.xlu0 %v261, 64
  %v664 = vpop.permute.xlu0 %663
  %665 = vrot.lane.b32.xlu0 %v262, 64
  %v666 = vpop.permute.xlu0 %665
  %675 = vmatprep.subr.mxu0 0.0
  %676 = vmatpush1.msra.mxu0 %v652
  %677 = vmatprep.subr.mxu0 0.0
  %678 = vmatpush1.msra.mxu0 %v654
  %679 = vmatprep.subr.mxu0 0.0
  %680 = vmatpush1.msra.mxu0 %v656
  %681 = vmatprep.subr.mxu0 0.0
  %682 = vmatpush1.msra.mxu0 %v658
  %683 = vmatprep.subr.mxu0 0.0
  %684 = vmatpush1.msra.mxu0 %v660
  %685 = vmatprep.subr.mxu0 0.0
  %686 = vmatpush1.msra.mxu0 %v662
  %687 = vmatprep.subr.mxu0 0.0
  %688 = vmatpush1.msra.mxu0 %v664
  %689 = vmatprep.subr.mxu0 0.0
  %690 = vmatpush1.msra.mxu0 %v666
  %691 = vmatprep.subr.mxu0 0.0
  %692 = vmatpush1.msra.mxu0 0.0
  %693 = vmatprep.subr.mxu0 0.0
  %694 = vmatpush1.msra.mxu0 0.0
  %695 = vmatprep.subr.mxu0 0.0
  %696 = vmatpush1.msra.mxu0 0.0
  %697 = vmatprep.subr.mxu0 0.0
  %698 = vmatpush1.msra.mxu0 0.0
  %699 = vmatprep.subr.mxu0 0.0
  %700 = vmatpush1.msra.mxu0 0.0
  %701 = vmatprep.subr.mxu0 0.0
  %702 = vmatpush1.msra.mxu0 0.0
  %703 = vmatprep.subr.mxu0 0.0
  %704 = vmatpush1.msra.mxu0 0.0
  %705 = vmatprep.subr.mxu0 0.0
  %706 = vmatpush1.msra.mxu0 0.0
  %707 = vmatprep.subr.mxu0 0.0
  %708 = vmatpush1.msra.mxu0 0.0
  %709 = vmatprep.subr.mxu0 0.0
  %710 = vmatpush1.msra.mxu0 0.0
  %711 = vmatprep.subr.mxu0 0.0
  %712 = vmatpush1.msra.mxu0 0.0
  %713 = vmatprep.subr.mxu0 0.0
  %714 = vmatpush1.msra.mxu0 0.0
  %715 = vmatprep.subr.mxu0 0.0
  %716 = vmatpush1.msra.mxu0 0.0
  %717 = vmatprep.subr.mxu0 0.0
  %718 = vmatpush1.msra.mxu0 0.0
  %719 = vmatprep.subr.mxu0 0.0
  %720 = vmatpush1.msra.mxu0 0.0
  %721 = vmatprep.subr.mxu0 0.0
  %722 = vmatpush1.msra.mxu0 0.0
  %723 = vmatprep.subr.mxu0 0.0
  %724 = vmatpush1.msra.mxu0 0.0
  %725 = vmatprep.subr.mxu0 0.0
  %726 = vmatpush1.msra.mxu0 0.0
  %727 = vmatprep.subr.mxu0 0.0
  %728 = vmatpush1.msra.mxu0 0.0
  %729 = vmatprep.subr.mxu0 0.0
  %730 = vmatpush1.msra.mxu0 0.0
  %731 = vmatprep.subr.mxu0 0.0
  %732 = vmatpush1.msra.mxu0 0.0
  %733 = vmatprep.subr.mxu0 0.0
  %734 = vmatpush1.msra.mxu0 0.0
  %735 = vmatprep.subr.mxu0 0.0
  %736 = vmatpush1.msra.mxu0 0.0
  %737 = vmatprep.subr.mxu0 0.0
  %738 = vmatpush1.msra.mxu0 0.0
  %739 = vmatprep.mubr.f32.mxu0 0.0
  %740 = vmatmul.mubr.f32.gmra.mrb[0].mxu0 %v460
  %v741 = vpop.f32.mrb[0].mxu0
  %v742 = vadd.f32 0.0, %v741
  %v743 = vpop.f32.mrb[0].mxu0
  %744 = vmatprep.mubr.f32.mxu0 0.0
  %745 = vmatmul.mubr.f32.gmra.mrb[0].mxu0 %v463
  %v746 = vpop.f32.mrb[0].mxu0
  %v747 = vadd.f32 0.0, %v746
  %v748 = vpop.f32.mrb[0].mxu0
  %749 = vdwg.mxu0
  %v750 = vmul.f32 %v742, %v540
  %v751 = vmul.f32 %v747, %v541
  %v752 = vld [vmem:[%s2] sm:$0xff]
  %v753 = vld [vmem:[%s2 + $0x8] sm:$0xff]
  %v754 = vld [vmem:[%s2 + $0x10] sm:$0xff]
  %v755 = vld [vmem:[%s2 + $0x18] sm:$0xff]
  %v757 = vsel %vm44, %v649, 0
  %v760 = vsel %vm44, %v650, 0
  %762 = vmatprep.subr.mxu0 0.0
  %763 = vmatpush1.msra.mxu0 %v752
  %764 = vmatprep.subr.mxu0 0.0
  %765 = vmatpush1.msra.mxu0 %v753
  %766 = vmatprep.subr.mxu0 0.0
  %767 = vmatpush1.msra.mxu0 %v754
  %768 = vmatprep.subr.mxu0 0.0
  %769 = vmatpush1.msra.mxu0 %v755
  %770 = vmatprep.subr.mxu0 0.0
  %771 = vmatpush1.msra.mxu0 0.0
  %772 = vmatprep.subr.mxu0 0.0
  %773 = vmatpush1.msra.mxu0 0.0
  %774 = vmatprep.subr.mxu0 0.0
  %775 = vmatpush1.msra.mxu0 0.0
  %776 = vmatprep.subr.mxu0 0.0
  %777 = vmatpush1.msra.mxu0 0.0
  %778 = vmatprep.subr.mxu0 0.0
  %779 = vmatpush1.msra.mxu0 0.0
  %780 = vmatprep.subr.mxu0 0.0
  %781 = vmatpush1.msra.mxu0 0.0
  %782 = vmatprep.subr.mxu0 0.0
  %783 = vmatpush1.msra.mxu0 0.0
  %784 = vmatprep.subr.mxu0 0.0
  %785 = vmatpush1.msra.mxu0 0.0
  %786 = vmatprep.subr.mxu0 0.0
  %787 = vmatpush1.msra.mxu0 0.0
  %788 = vmatprep.subr.mxu0 0.0
  %789 = vmatpush1.msra.mxu0 0.0
  %790 = vmatprep.subr.mxu0 0.0
  %791 = vmatpush1.msra.mxu0 0.0
  %792 = vmatprep.subr.mxu0 0.0
  %793 = vmatpush1.msra.mxu0 0.0
  %794 = vmatprep.subr.mxu0 0.0
  %795 = vmatpush1.msra.mxu0 0.0
  %796 = vmatprep.subr.mxu0 0.0
  %797 = vmatpush1.msra.mxu0 0.0
  %798 = vmatprep.subr.mxu0 0.0
  %799 = vmatpush1.msra.mxu0 0.0
  %800 = vmatprep.subr.mxu0 0.0
  %801 = vmatpush1.msra.mxu0 0.0
  %802 = vmatprep.subr.mxu0 0.0
  %803 = vmatpush1.msra.mxu0 0.0
  %804 = vmatprep.subr.mxu0 0.0
  %805 = vmatpush1.msra.mxu0 0.0
  %806 = vmatprep.subr.mxu0 0.0
  %807 = vmatpush1.msra.mxu0 0.0
  %808 = vmatprep.subr.mxu0 0.0
  %809 = vmatpush1.msra.mxu0 0.0
  %810 = vmatprep.subr.mxu0 0.0
  %811 = vmatpush1.msra.mxu0 0.0
  %812 = vmatprep.subr.mxu0 0.0
  %813 = vmatpush1.msra.mxu0 0.0
  %814 = vmatprep.subr.mxu0 0.0
  %815 = vmatpush1.msra.mxu0 0.0
  %816 = vmatprep.subr.mxu0 0.0
  %817 = vmatpush1.msra.mxu0 0.0
  %818 = vmatprep.subr.mxu0 0.0
  %819 = vmatpush1.msra.mxu0 0.0
  %820 = vmatprep.subr.mxu0 0.0
  %821 = vmatpush1.msra.mxu0 0.0
  %822 = vmatprep.subr.mxu0 0.0
  %823 = vmatpush1.msra.mxu0 0.0
  %824 = vmatprep.subr.mxu0 0.0
  %825 = vmatpush1.msra.mxu0 0.0
  %826 = vmatprep.mubr.f32.mxu0 0.0
  %827 = vmatmul.mubr.f32.gmra.mrb[0].mxu0 %v757
  %v828 = vpop.f32.mrb[0].mxu0
  %v829 = vadd.f32 0.0, %v828
  %v830 = vpop.f32.mrb[0].mxu0
  %831 = vmatprep.mubr.f32.mxu0 0.0
  %832 = vmatmul.mubr.f32.gmra.mrb[0].mxu0 %v760
  %v833 = vpop.f32.mrb[0].mxu0
  %v834 = vadd.f32 0.0, %v833
  %v835 = vpop.f32.mrb[0].mxu0
  %836 = vdwg.mxu0
  %v837 = vadd.f32 %v38, %v829
  %v838 = vadd.f32 %v39, %v834
  %v839 = vmul.f32 %v837, %v837
  %v840 = vmul.f32 %v838, %v838
  %v841 = vsel %vm44, %v839, 0.0
  %842 = vadd.xlane.f32.xlu0 %v841
  %v843 = vpop.xlane.xlu0 %842
  %v844 = vsel %vm44, %v840, 0.0
  %845 = vadd.xlane.f32.xlu0 %v844
  %v846 = vpop.xlane.xlu0 %845
  %v847 = vrcp.pop 32.0
  %v848 = vmul.f32 %v843, %v847
  %v849 = vmul.f32 %v846, %v847
  %v850 = vadd.f32 %v848, 1e-08
  %v851 = vadd.f32 %v849, 1e-08
  %v852 = vrsqrt.pop %v850
  %v853 = vrsqrt.pop %v851
  %v854 = vmul.f32 %v837, %v852
  %v855 = vmul.f32 %v838, %v853
  %v856 = vld [vmem:[%s7] sm:$0x1]
  %v858 = vlaneseq
  %v859 = vshrl.u32 %v858, 7
  %v860 = vsub.s32 0, %v859
  %v861 = vrot.slane %v856, %v860
  %v863 = vmul.f32 %v854, %v861
  %v864 = vmul.f32 %v855, %v861
  %v865 = vld [vmem:[%s8] sm:$0xff]
  %v866 = vld [vmem:[%s8 + $0x8] sm:$0xff]
  %v867 = vld [vmem:[%s8 + $0x10] sm:$0xff]
  %v868 = vld [vmem:[%s8 + $0x18] sm:$0xff]
  %v870 = vsel %vm44, %v863, 0
  %v873 = vsel %vm44, %v864, 0
  %875 = vmatprep.subr.mxu0 0.0
  %876 = vmatpush1.msra.mxu0 %v865
  %877 = vmatprep.subr.mxu0 0.0
  %878 = vmatpush1.msra.mxu0 %v866
  %879 = vmatprep.subr.mxu0 0.0
  %880 = vmatpush1.msra.mxu0 %v867
  %881 = vmatprep.subr.mxu0 0.0
  %882 = vmatpush1.msra.mxu0 %v868
  %883 = vmatprep.subr.mxu0 0.0
  %884 = vmatpush1.msra.mxu0 0.0
  %885 = vmatprep.subr.mxu0 0.0
  %886 = vmatpush1.msra.mxu0 0.0
  %887 = vmatprep.subr.mxu0 0.0
  %888 = vmatpush1.msra.mxu0 0.0
  %889 = vmatprep.subr.mxu0 0.0
  %890 = vmatpush1.msra.mxu0 0.0
  %891 = vmatprep.subr.mxu0 0.0
  %892 = vmatpush1.msra.mxu0 0.0
  %893 = vmatprep.subr.mxu0 0.0
  %894 = vmatpush1.msra.mxu0 0.0
  %895 = vmatprep.subr.mxu0 0.0
  %896 = vmatpush1.msra.mxu0 0.0
  %897 = vmatprep.subr.mxu0 0.0
  %898 = vmatpush1.msra.mxu0 0.0
  %899 = vmatprep.subr.mxu0 0.0
  %900 = vmatpush1.msra.mxu0 0.0
  %901 = vmatprep.subr.mxu0 0.0
  %902 = vmatpush1.msra.mxu0 0.0
  %903 = vmatprep.subr.mxu0 0.0
  %904 = vmatpush1.msra.mxu0 0.0
  %905 = vmatprep.subr.mxu0 0.0
  %906 = vmatpush1.msra.mxu0 0.0
  %907 = vmatprep.subr.mxu0 0.0
  %908 = vmatpush1.msra.mxu0 0.0
  %909 = vmatprep.subr.mxu0 0.0
  %910 = vmatpush1.msra.mxu0 0.0
  %911 = vmatprep.subr.mxu0 0.0
  %912 = vmatpush1.msra.mxu0 0.0
  %913 = vmatprep.subr.mxu0 0.0
  %914 = vmatpush1.msra.mxu0 0.0
  %915 = vmatprep.subr.mxu0 0.0
  %916 = vmatpush1.msra.mxu0 0.0
  %917 = vmatprep.subr.mxu0 0.0
  %918 = vmatpush1.msra.mxu0 0.0
  %919 = vmatprep.subr.mxu0 0.0
  %920 = vmatpush1.msra.mxu0 0.0
  %921 = vmatprep.subr.mxu0 0.0
  %922 = vmatpush1.msra.mxu0 0.0
  %923 = vmatprep.subr.mxu0 0.0
  %924 = vmatpush1.msra.mxu0 0.0
  %925 = vmatprep.subr.mxu0 0.0
  %926 = vmatpush1.msra.mxu0 0.0
  %927 = vmatprep.subr.mxu0 0.0
  %928 = vmatpush1.msra.mxu0 0.0
  %929 = vmatprep.subr.mxu0 0.0
  %930 = vmatpush1.msra.mxu0 0.0
  %931 = vmatprep.subr.mxu0 0.0
  %932 = vmatpush1.msra.mxu0 0.0
  %933 = vmatprep.subr.mxu0 0.0
  %934 = vmatpush1.msra.mxu0 0.0
  %935 = vmatprep.subr.mxu0 0.0
  %936 = vmatpush1.msra.mxu0 0.0
  %937 = vmatprep.subr.mxu0 0.0
  %938 = vmatpush1.msra.mxu0 0.0
  %939 = vmatprep.mubr.f32.mxu0 0.0
  %940 = vmatmul.mubr.f32.gmra.mrb[0].mxu0 %v870
  %v941 = vpop.f32.mrb[0].mxu0
  %v942 = vadd.f32 0.0, %v941
  %v943 = vpop.f32.mrb[0].mxu0
  %944 = vmatprep.mubr.f32.mxu0 0.0
  %945 = vmatmul.mubr.f32.gmra.mrb[0].mxu0 %v873
  %v946 = vpop.f32.mrb[0].mxu0
  %v947 = vadd.f32 0.0, %v946
  %v948 = vpop.f32.mrb[0].mxu0
  %949 = vdwg.mxu0
  %v950 = vmul.f32 %v942, 0.5
  %v951 = vmul.f32 %v947, 0.5
  %v952 = vmul.f32 %v942, 0.70710677
  %v953 = vmul.f32 %v947, 0.70710677
  %v954 = verf.f32.pop %v952
  %v955 = verf.f32.pop %v953
  %v956 = vadd.f32 %v954, 1.0
  %v957 = vadd.f32 %v955, 1.0
  %v958 = vmul.f32 %v950, %v956
  %v959 = vmul.f32 %v951, %v957
  %v960 = vld [vmem:[%s9] sm:$0xff]
  %v961 = vld [vmem:[%s9 + $0x8] sm:$0xff]
  %v962 = vld [vmem:[%s9 + $0x10] sm:$0xff]
  %v963 = vld [vmem:[%s9 + $0x18] sm:$0xff]
  %v964 = vld [vmem:[%s9 + $0x20] sm:$0xff]
  %v965 = vld [vmem:[%s9 + $0x28] sm:$0xff]
  %v966 = vld [vmem:[%s9 + $0x30] sm:$0xff]
  %v967 = vld [vmem:[%s9 + $0x38] sm:$0xff]
  %v969 = vsel %vm422, %v958, 0
  %v972 = vsel %vm422, %v959, 0
  %974 = vmatprep.subr.mxu0 0.0
  %975 = vmatpush1.msra.mxu0 %v960
  %976 = vmatprep.subr.mxu0 0.0
  %977 = vmatpush1.msra.mxu0 %v961
  %978 = vmatprep.subr.mxu0 0.0
  %979 = vmatpush1.msra.mxu0 %v962
  %980 = vmatprep.subr.mxu0 0.0
  %981 = vmatpush1.msra.mxu0 %v963
  %982 = vmatprep.subr.mxu0 0.0
  %983 = vmatpush1.msra.mxu0 %v964
  %984 = vmatprep.subr.mxu0 0.0
  %985 = vmatpush1.msra.mxu0 %v965
  %986 = vmatprep.subr.mxu0 0.0
  %987 = vmatpush1.msra.mxu0 %v966
  %988 = vmatprep.subr.mxu0 0.0
  %989 = vmatpush1.msra.mxu0 %v967
  %990 = vmatprep.subr.mxu0 0.0
  %991 = vmatpush1.msra.mxu0 0.0
  %992 = vmatprep.subr.mxu0 0.0
  %993 = vmatpush1.msra.mxu0 0.0
  %994 = vmatprep.subr.mxu0 0.0
  %995 = vmatpush1.msra.mxu0 0.0
  %996 = vmatprep.subr.mxu0 0.0
  %997 = vmatpush1.msra.mxu0 0.0
  %998 = vmatprep.subr.mxu0 0.0
  %999 = vmatpush1.msra.mxu0 0.0
  %1000 = vmatprep.subr.mxu0 0.0
  %1001 = vmatpush1.msra.mxu0 0.0
  %1002 = vmatprep.subr.mxu0 0.0
  %1003 = vmatpush1.msra.mxu0 0.0
  %1004 = vmatprep.subr.mxu0 0.0
  %1005 = vmatpush1.msra.mxu0 0.0
  %1006 = vmatprep.subr.mxu0 0.0
  %1007 = vmatpush1.msra.mxu0 0.0
  %1008 = vmatprep.subr.mxu0 0.0
  %1009 = vmatpush1.msra.mxu0 0.0
  %1010 = vmatprep.subr.mxu0 0.0
  %1011 = vmatpush1.msra.mxu0 0.0
  %1012 = vmatprep.subr.mxu0 0.0
  %1013 = vmatpush1.msra.mxu0 0.0
  %1014 = vmatprep.subr.mxu0 0.0
  %1015 = vmatpush1.msra.mxu0 0.0
  %1016 = vmatprep.subr.mxu0 0.0
  %1017 = vmatpush1.msra.mxu0 0.0
  %1018 = vmatprep.subr.mxu0 0.0
  %1019 = vmatpush1.msra.mxu0 0.0
  %1020 = vmatprep.subr.mxu0 0.0
  %1021 = vmatpush1.msra.mxu0 0.0
  %1022 = vmatprep.subr.mxu0 0.0
  %1023 = vmatpush1.msra.mxu0 0.0
  %1024 = vmatprep.subr.mxu0 0.0
  %1025 = vmatpush1.msra.mxu0 0.0
  %1026 = vmatprep.subr.mxu0 0.0
  %1027 = vmatpush1.msra.mxu0 0.0
  %1028 = vmatprep.subr.mxu0 0.0
  %1029 = vmatpush1.msra.mxu0 0.0
  %1030 = vmatprep.subr.mxu0 0.0
  %1031 = vmatpush1.msra.mxu0 0.0
  %1032 = vmatprep.subr.mxu0 0.0
  %1033 = vmatpush1.msra.mxu0 0.0
  %1034 = vmatprep.subr.mxu0 0.0
  %1035 = vmatpush1.msra.mxu0 0.0
  %1036 = vmatprep.subr.mxu0 0.0
  %1037 = vmatpush1.msra.mxu0 0.0
  %1038 = vmatprep.mubr.f32.mxu0 0.0
  %1039 = vmatmul.mubr.f32.gmra.mrb[0].mxu0 %v969
  %v1040 = vpop.f32.mrb[0].mxu0
  %v1041 = vadd.f32 0.0, %v1040
  %v1042 = vpop.f32.mrb[0].mxu0
  %1043 = vmatprep.mubr.f32.mxu0 0.0
  %1044 = vmatmul.mubr.f32.gmra.mrb[0].mxu0 %v972
  %v1045 = vpop.f32.mrb[0].mxu0
  %v1046 = vadd.f32 0.0, %v1045
  %v1047 = vpop.f32.mrb[0].mxu0
  %1048 = vdwg.mxu0
  %v1049 = vadd.f32 %v863, %v1041
  %v1050 = vadd.f32 %v864, %v1046
  %v1051 = vmul.f32 %v1049, %v1049
  %v1052 = vmul.f32 %v1050, %v1050
  %v1053 = vsel %vm44, %v1051, 0.0
  %1054 = vadd.xlane.f32.xlu0 %v1053
  %v1055 = vpop.xlane.xlu0 %1054
  %v1056 = vsel %vm44, %v1052, 0.0
  %1057 = vadd.xlane.f32.xlu0 %v1056
  %v1058 = vpop.xlane.xlu0 %1057
  %v1059 = vmul.f32 %v1055, %v847
  %v1060 = vmul.f32 %v1058, %v847
  %v1061 = vadd.f32 %v1059, 1e-08
  %v1062 = vadd.f32 %v1060, 1e-08
  %v1063 = vrsqrt.pop %v1061
  %v1064 = vrsqrt.pop %v1062
  %v1065 = vmul.f32 %v1049, %v1063
  %v1066 = vmul.f32 %v1050, %v1064
  %v1067 = vld [vmem:[%s10] sm:$0x1]
  %v1069 = vlaneseq
  %v1070 = vshrl.u32 %v1069, 7
  %v1071 = vsub.s32 0, %v1070
  %v1072 = vrot.slane %v1067, %v1071
  %v1074 = vmul.f32 %v1065, %v1072
  %v1075 = vmul.f32 %v1066, %v1072
  %1078 = vrot.lane.b32.xlu0 %v750, 32
  %v1079 = vpop.permute.xlu0 %1078
  %1080 = vrot.lane.b32.xlu0 %v751, 32
  %v1081 = vpop.permute.xlu0 %1080
  %v1084 = vsel %vm44, %v1074, %v1079
  %v1085 = vsel %vm44, %v1075, %v1081
  %1086 = vst.msk [vmem:[%s11] sm:$0xff] %vm422, %v1084
  %1087 = vst.msk [vmem:[%s11 + $0x8] sm:$0xff] %vm422, %v1085
  // Predicated region
  $region46: #{decoder_layer.1} parent=0 // pred_check
    _
  $region47: #{decoder_layer.1} parent=0 // pred_check_branch
    %1089 = sbr.rel (0) target = $region49
  $region48: #{decoder_layer.1} parent=0 // pred_region
    _
  $region49: #{decoder_layer.1} parent=0 // pred_fallthru
    _
  // Predicated region
  $region50: #{decoder_layer.1} parent=0 // pred_check
    _
  $region51: #{decoder_layer.1} parent=0 // pred_check_branch
    %1091 = sbr.rel (0) target = $region53
  $region52: #{decoder_layer.1} parent=0 // pred_region
    _
  $region53: #{decoder_layer.1} parent=0 // pred_fallthru
    _

</llo_original>
